<compile_context>
chip_gen: v7x
topology: tpu7x:2x2x1
jax: 0.10.0
libtpu: 0.0.40
codegen_flags: <defaults>
</compile_context>

<pallas_src>
import jax
import jax.numpy as jnp
from jax.experimental import pallas as pl
from jax.experimental.pallas import tpu as pltpu


def _cdiv(a: int, b: int) -> int:
    return (a + b - 1) // b


def _round_up(n: int, m: int) -> int:
    return _cdiv(n, m) * m


def scalednet_kernel(x_ref, wh_ref, bh_ref, wo_ref, bo_ref, y_ref):
    # In-kernel bf16 cast of the input activations (avoids a separate XLA cast
    # pass over x in HBM; the VPU cast is hidden under the DMA/MXU work).
    x_bf16 = x_ref[...].astype(jnp.bfloat16)

    # hidden pre-activation: (TB, F)bf16 @ (F, H)bf16 -> f32 acc, + (1, H)f32
    x_h = jnp.dot(x_bf16, wh_ref[...],
                  preferred_element_type=jnp.float32) + bh_ref[...]

    # relu in f32 on the VPU (v5e has no bf16 VALU)
    y_h = jnp.maximum(x_h, 0.0)

    # output: (TB, H)bf16 @ (H, 128)bf16 -> f32 acc, + (1, 128)f32.
    # No output activation (matches ScaledNet.forward).
    y = jnp.dot(y_h.astype(jnp.bfloat16), wo_ref[...],
                preferred_element_type=jnp.float32) + bo_ref[...]

    # bf16 writeback halves the dominant (lane-padded) HBM store stream.
    y_ref[...] = y.astype(y_ref.dtype)


def scalednet_forward(x, W_h, b_h, W_o, b_o, *, block_batch=2048):
    """x: (B, F); W_h: (F, H); b_h: (H,); W_o: (H, O); b_o: (O,) -> (B, O) f32."""
    B, F = x.shape
    H = W_h.shape[1]
    O = W_o.shape[1]

    # Split the batch as evenly as possible into ~B/block_batch grid steps and
    # round the tile to a multiple of 16 (bf16 packed sublane tile). The last
    # grid step is a boundary block (garbage rows never reach the sliced
    # result), so no wrapper-side jnp.pad pass over x is needed.
    target_steps = max(1, _cdiv(B, block_batch))
    TB = min(_round_up(_cdiv(B, target_steps), 16), _round_up(B, 16))
    grid = (_cdiv(B, TB),)

    # Lane-dense output: pad the output dim to a full 128-lane multiple
    # (zero-padded lanes contribute nothing and are sliced off below).
    O_pad = _round_up(max(O, 128), 128)

    # Weights are tiny and VMEM-resident across the whole grid: prepare them
    # once in the wrapper (bf16 matmul operands, f32 biases).
    W_h_b = W_h.astype(jnp.bfloat16)
    W_o_b = jnp.pad(W_o.astype(jnp.float32),
                    ((0, 0), (0, O_pad - O))).astype(jnp.bfloat16)
    b_h2 = b_h.reshape(1, H).astype(jnp.float32)
    b_o2 = jnp.pad(b_o.astype(jnp.float32), (0, O_pad - O)).reshape(1, O_pad)

    cost = pl.CostEstimate(
        flops=2 * B * F * H + 2 * B * H * O,   # real O, not O_pad
        transcendentals=0,
        bytes_accessed=(B * F * 4                                # x read (f32)
                        + W_h_b.size * 2 + W_o_b.size * 2        # weights (bf16)
                        + b_h2.size * 4 + b_o2.size * 4          # biases (f32)
                        + B * O_pad * 2),                        # y write (bf16)
    )

    y_pad = pl.pallas_call(
        scalednet_kernel,
        out_shape=jax.ShapeDtypeStruct((B, O_pad), jnp.bfloat16),
        grid=grid,
        in_specs=[
            pl.BlockSpec((TB, F), lambda i: (i, 0)),       # x: tiled over batch rows
            pl.BlockSpec((F, H), lambda i: (0, 0)),        # W_h: VMEM-resident
            pl.BlockSpec((1, H), lambda i: (0, 0)),        # b_h: VMEM-resident
            pl.BlockSpec((H, O_pad), lambda i: (0, 0)),    # W_o (lane-padded): resident
            pl.BlockSpec((1, O_pad), lambda i: (0, 0)),    # b_o (lane-padded): resident
        ],
        out_specs=pl.BlockSpec((TB, O_pad), lambda i: (i, 0)),
        compiler_params=pltpu.CompilerParams(
            dimension_semantics=("parallel",)),
        cost_estimate=cost,
    )(x.astype(jnp.float32), W_h_b, b_h2, W_o_b, b_o2)

    # strip the zero-padded output lanes; return f32 like the PyTorch module
    return y_pad[:, :O].astype(jnp.float32)


if __name__ == "__main__":
    # ScaledNet hyperparameters (small, synthetic)
    n_features = 32     # 30 input features + 2 context units
    n_hidden = 32
    n_out = 2
    weight_init = 0.1
    ctx_w_init = 1.0
    batch = 20          # not a multiple of the batch tile -> exercises boundary block

    key = jax.random.PRNGKey(0)
    k_x, k_win, k_wc, k_wo = jax.random.split(key, 4)

    # deterministic parameter init mirroring ScaledNet.__init__
    W_hin = jax.random.normal(k_win, (n_features - 2, n_hidden), jnp.float32) * weight_init
    W_hc = jax.random.normal(k_wc, (2, n_hidden), jnp.float32) * ctx_w_init
    W_h = jnp.concatenate((W_hin, W_hc), axis=0)
    b_h = jnp.zeros((n_hidden,), jnp.float32) + 0.1
    W_o = jax.random.normal(k_wo, (n_hidden, n_out), jnp.float32) * weight_init
    b_o = jnp.zeros((n_out,), jnp.float32)

    x = jax.random.normal(k_x, (batch, n_features), jnp.float32)

    # small block_batch so the example actually runs a multi-step grid
    # (real runs should use the default block_batch=2048)
    y = scalednet_forward(x, W_h, b_h, W_o, b_o, block_batch=8)
    jax.block_until_ready(y)

    # reference with identical numerics (bf16 operands, f32 accumulate,
    # bf16 output rounding, no output activation)
    x_h = jnp.dot(x.astype(jnp.bfloat16), W_h.astype(jnp.bfloat16),
                  preferred_element_type=jnp.float32) + b_h
    y_h = jnp.maximum(x_h, 0.0)
    y_ref = jnp.dot(y_h.astype(jnp.bfloat16), W_o.astype(jnp.bfloat16),
                    preferred_element_type=jnp.float32) + b_o
    y_ref = y_ref.astype(jnp.bfloat16).astype(jnp.float32)

    assert y.shape == (batch, n_out)
    assert jnp.allclose(y, y_ref, atol=2e-3, rtol=2e-3)

    # loose sanity check against pure-f32 math (bf16 operand/output rounding only)
    y_f32 = jnp.maximum(x @ W_h + b_h, 0.0) @ W_o + b_o
    assert jnp.allclose(y, y_f32, atol=5e-2, rtol=5e-2)

    print("KERNEL_OK")
</pallas_src>

<mosaic_0001>
module attributes {stable_mosaic.version = 11 : i64} {
  func.func @scalednet_kernel(%arg0: i32, %arg1: memref<16x32xf32, #tpu.memory_space<vmem>>, %arg2: memref<32x32xbf16, #tpu.memory_space<vmem>>, %arg3: memref<1x32xf32, #tpu.memory_space<vmem>>, %arg4: memref<32x128xbf16, #tpu.memory_space<vmem>>, %arg5: memref<1x128xf32, #tpu.memory_space<vmem>>, %arg6: memref<16x128xbf16, #tpu.memory_space<vmem>>) attributes {dimension_semantics = [#tpu.dimension_semantics<parallel>], iteration_bounds = array<i64: 2>, scalar_prefetch = 0 : i64, scratch_operands = 0 : i64, tpu.core_type = #tpu.core_type<tc>, window_params = [{transform_indices = @transform_0, window_bounds = array<i64: 16, 32>}, {pipeline_mode = #tpu.pipeline_mode<synchronous>, transform_indices = @transform_1, window_bounds = array<i64: 32, 32>}, {pipeline_mode = #tpu.pipeline_mode<synchronous>, transform_indices = @transform_2, window_bounds = array<i64: 1, 32>}, {pipeline_mode = #tpu.pipeline_mode<synchronous>, transform_indices = @transform_3, window_bounds = array<i64: 32, 128>}, {pipeline_mode = #tpu.pipeline_mode<synchronous>, transform_indices = @transform_4, window_bounds = array<i64: 1, 128>}, {transform_indices = @transform_5, window_bounds = array<i64: 16, 128>}]} {
    %c0 = arith.constant 0 : index
    %c0_0 = arith.constant 0 : index
    %0 = vector.load %arg1[%c0, %c0_0] : memref<16x32xf32, #tpu.memory_space<vmem>>, vector<16x32xf32>
    %1 = arith.truncf %0 : vector<16x32xf32> to vector<16x32xbf16>
    %c0_1 = arith.constant 0 : index
    %c0_2 = arith.constant 0 : index
    %2 = vector.load %arg2[%c0_1, %c0_2] : memref<32x32xbf16, #tpu.memory_space<vmem>>, vector<32x32xbf16>
    %cst = arith.constant dense<0.000000e+00> : vector<16x32xf32>
    %3 = tpu.matmul %1, %2, %cst {dimension_numbers = #tpu.dot_dimension_numbers<[1], [0], [0], [1], [0, 0, 1, 1], [], []>} : vector<16x32xbf16>, vector<32x32xbf16>, vector<16x32xf32> -> vector<16x32xf32>
    %c0_3 = arith.constant 0 : index
    %c0_4 = arith.constant 0 : index
    %4 = vector.load %arg3[%c0_3, %c0_4] : memref<1x32xf32, #tpu.memory_space<vmem>>, vector<1x32xf32>
    %5 = vector.broadcast %4 : vector<1x32xf32> to vector<16x32xf32>
    %6 = arith.addf %3, %5 : vector<16x32xf32>
    %cst_5 = arith.constant 0.000000e+00 : f32
    %7 = vector.broadcast %cst_5 : f32 to vector<16x32xf32>
    %8 = arith.maximumf %6, %7 : vector<16x32xf32>
    %9 = arith.truncf %8 : vector<16x32xf32> to vector<16x32xbf16>
    %c0_6 = arith.constant 0 : index
    %c0_7 = arith.constant 0 : index
    %10 = vector.load %arg4[%c0_6, %c0_7] : memref<32x128xbf16, #tpu.memory_space<vmem>>, vector<32x128xbf16>
    %cst_8 = arith.constant dense<0.000000e+00> : vector<16x128xf32>
    %11 = tpu.matmul %9, %10, %cst_8 {dimension_numbers = #tpu.dot_dimension_numbers<[1], [0], [0], [1], [0, 0, 1, 1], [], []>} : vector<16x32xbf16>, vector<32x128xbf16>, vector<16x128xf32> -> vector<16x128xf32>
    %c0_9 = arith.constant 0 : index
    %c0_10 = arith.constant 0 : index
    %12 = vector.load %arg5[%c0_9, %c0_10] : memref<1x128xf32, #tpu.memory_space<vmem>>, vector<1x128xf32>
    %13 = vector.broadcast %12 : vector<1x128xf32> to vector<16x128xf32>
    %14 = arith.addf %11, %13 : vector<16x128xf32>
    %15 = arith.truncf %14 : vector<16x128xf32> to vector<16x128xbf16>
    %c0_11 = arith.constant 0 : index
    %c0_12 = arith.constant 0 : index
    %16 = vector.load %arg6[%c0_11, %c0_12] : memref<16x128xbf16, #tpu.memory_space<vmem>>, vector<16x128xbf16>
    tpu.vector_store %arg6[%c0_11, %c0_12], %15 {strides = array<i32>} : memref<16x128xbf16, #tpu.memory_space<vmem>>, vector<16x128xbf16>,
    return
  }
  func.func @transform_0(%arg0: i32) -> (i32, i32) {
    %c0_i32 = arith.constant 0 : i32
    %c0_i32_0 = arith.constant 0 : i32
    return %arg0, %c0_i32 : i32, i32
  }
  func.func @transform_1(%arg0: i32) -> (i32, i32) {
    %c0_i32 = arith.constant 0 : i32
    %c0_i32_0 = arith.constant 0 : i32
    %c0_i32_1 = arith.constant 0 : i32
    return %c0_i32, %c0_i32_0 : i32, i32
  }
  func.func @transform_2(%arg0: i32) -> (i32, i32) {
    %c0_i32 = arith.constant 0 : i32
    %c0_i32_0 = arith.constant 0 : i32
    %c0_i32_1 = arith.constant 0 : i32
    return %c0_i32, %c0_i32_0 : i32, i32
  }
  func.func @transform_3(%arg0: i32) -> (i32, i32) {
    %c0_i32 = arith.constant 0 : i32
    %c0_i32_0 = arith.constant 0 : i32
    %c0_i32_1 = arith.constant 0 : i32
    return %c0_i32, %c0_i32_0 : i32, i32
  }
  func.func @transform_4(%arg0: i32) -> (i32, i32) {
    %c0_i32 = arith.constant 0 : i32
    %c0_i32_0 = arith.constant 0 : i32
    %c0_i32_1 = arith.constant 0 : i32
    return %c0_i32, %c0_i32_0 : i32, i32
  }
  func.func @transform_5(%arg0: i32) -> (i32, i32) {
    %c0_i32 = arith.constant 0 : i32
    %c0_i32_0 = arith.constant 0 : i32
    return %arg0, %c0_i32 : i32, i32
  }
}

</mosaic_0001>

<llo_original>
// kernel: tpu_custom_call.1
$region0: #{tpu_custom_call.1}
  #allocation0 [shape = 'u32[]', space=smem, size = 0x4, offset = 0x4, fixed_abs, tag = 'smem constant byte address 0x4 - core index']
  #allocation1 [shape = 'u32[144,128]{1,0:T(1,128)}', space=vmem, size = 0x12000, scoped, tag = 'internal scratch']
  %s0 = inlined_call_operand.hbm [shape: f32[20,32], index: 0, kind: input, shape index: {}]
  %s1 = inlined_call_operand.hbm [shape: bf16[32,32], index: 1, kind: input, shape index: {}]
  %s2 = inlined_call_operand.vmem [shape: f32[1,32], index: 2, kind: input, shape index: {}]
  %s3 = inlined_call_operand.hbm [shape: bf16[32,128], index: 3, kind: input, shape index: {}]
  %s4 = inlined_call_operand.vmem [shape: f32[1,128], index: 4, kind: input, shape index: {}]
  %s5 = inlined_call_operand.hbm [shape: bf16[20,128], index: 5, kind: output, shape index: {}]
  %s6 = sld [smem:[#allocation0]]
  $region65: #{tpu_custom_call.1} parent=0
    _
  %s8 = ssub.s32 1, %s6
  %s9 = scalar_select 0, %s8, %s6
  $region1: #{tpu_custom_call.1} parent=0
    #allocation2 [shape = 'u8[16384]{0}', space=vmem, size = 0x4000, scoped, tag = 'input window, operand 0']
    #allocation3 [shape = 's32[2]{0}', space=sflag, size = 0x8, scoped, tag = 'scoped memory for tpu_custom_call.1']
    #allocation4 [shape = 's32[2]{0}', space=sflag, size = 0x8, scoped, tag = 'scoped memory for tpu_custom_call.1']
    #allocation5 [shape = 'u8[8192]{0}', space=vmem, size = 0x2000, scoped, tag = 'input window, operand 1, single buffered']
    #allocation6 [shape = 's32[1]{0}', space=sflag, size = 0x4, scoped, tag = 'scoped memory for tpu_custom_call.1']
    #allocation7 [shape = 'u8[8192]{0}', space=vmem, size = 0x2000, scoped, tag = 'input window, operand 3, single buffered']
    #allocation8 [shape = 'u8[8192]{0}', space=vmem, size = 0x2000, scoped, tag = 'output window, operand 0']
    %10 = vsyncpa [#allocation3], 0
    %s11 = scalar_lea.sflag [#allocation3], 1
    %12 = vsyncpa %s11, 0
    %13 = vsyncpa [#allocation6], 0
    %14 = vsyncpa [#allocation4], 0
    %s15 = scalar_lea.sflag [#allocation4], 1
    %16 = vsyncpa %s15, 0
    loop: start=0, step=1, limit=4
    $region2: #{tpu_custom_call.1} parent=1 // loop_pre_header
      _
    $region3: #{tpu_custom_call.1} parent=1 // loop_header
      %s18 = sphi 0, %s22
      %p19 = scmp.ge.s32.totalorder %s18, 4
      %s28 = sphi 0, %s30
      %s31 = sphi 0, %s28
      %s32 = sphi 0, %s31
      %s48 = sphi 0, %s32
      %s52 = sphi 0, %s52
      %s54 = sphi 0, %s52
      %s55 = sphi 0, %s54
      %s69 = sphi 0, %s55
      %s73 = sphi 0, %s73
      %s75 = sphi 0, %s73
      %s76 = sphi 0, %s75
      %s90 = sphi 0, %s76
      %s94 = sphi 0, %s94
      %s96 = sphi 0, %s94
      %s97 = sphi 0, %s96
      %s111 = sphi 0, %s97
      %s115 = sphi 0, %s115
      %s117 = sphi 0, %s115
      %s118 = sphi 0, %s117
      %s132 = sphi 0, %s118
      %s138 = sphi 0, %s140
      %s141 = sphi 0, %s138
      %s142 = sphi 0, %s141
      %s158 = sphi 0, %s142
    $region4: #{tpu_custom_call.1} parent=1 // loop_header_branch
      %21 = sbr.rel (%p19) target = $region8
    $region5: #{tpu_custom_call.1} parent=1 // loop_body
      %s23 = ssub.s32 %s18, 1
      %s24 = ssub.s32 %s18, 2
      %s25 = sadd.s32 %s18, 1
      %s26 = ssub.s32 %s18, %s25
      %p27 = scmp.eq.s32.totalorder %s26, 0
      %s29 = sadd.s32 %s28, 1
      %s30 = scalar_select %p27, %s28, %s29
      %p33 = pneg %p27
      %p34 = scmp.eq.s32.totalorder %s18, 1
      %p35 = por %p33, %p34
      %p36 = scmp.ne.s32.totalorder %s28, %s31
      %p37 = scmp.eq.s32.totalorder %s18, 0
      %p38 = por %p36, %p37
      %p39 = scmp.ne.s32.totalorder %s28, %s31
      %p40 = scmp.eq.s32.totalorder %s23, 1
      %p41 = por %p39, %p40
      %p42 = scmp.ne.s32.totalorder %s31, %s32
      %p43 = scmp.eq.s32.totalorder %s23, 0
      %p44 = por %p42, %p43
      %p45 = scmp.ne.s32.totalorder %s31, %s32
      %p46 = scmp.eq.s32.totalorder %s24, 1
      %p47 = por %p45, %p46
      %p49 = scmp.ne.s32.totalorder %s32, %s48
      %p50 = scmp.eq.s32.totalorder %s24, 0
      %p51 = por %p49, %p50
      %s53 = sadd.s32 %s52, 1
      %p56 = scmp.eq.s32.totalorder %s18, 1
      %p57 = scmp.ne.s32.totalorder %s52, %s54
      %p58 = scmp.eq.s32.totalorder %s18, 0
      %p59 = por %p57, %p58
      %p60 = scmp.ne.s32.totalorder %s52, %s54
      %p61 = scmp.eq.s32.totalorder %s23, 1
      %p62 = por %p60, %p61
      %p63 = scmp.ne.s32.totalorder %s54, %s55
      %p64 = scmp.eq.s32.totalorder %s23, 0
      %p65 = por %p63, %p64
      %p66 = scmp.ne.s32.totalorder %s54, %s55
      %p67 = scmp.eq.s32.totalorder %s24, 1
      %p68 = por %p66, %p67
      %p70 = scmp.ne.s32.totalorder %s55, %s69
      %p71 = scmp.eq.s32.totalorder %s24, 0
      %p72 = por %p70, %p71
      %s74 = sadd.s32 %s73, 1
      %p77 = scmp.eq.s32.totalorder %s18, 1
      %p78 = scmp.ne.s32.totalorder %s73, %s75
      %p79 = scmp.eq.s32.totalorder %s18, 0
      %p80 = por %p78, %p79
      %p81 = scmp.ne.s32.totalorder %s73, %s75
      %p82 = scmp.eq.s32.totalorder %s23, 1
      %p83 = por %p81, %p82
      %p84 = scmp.ne.s32.totalorder %s75, %s76
      %p85 = scmp.eq.s32.totalorder %s23, 0
      %p86 = por %p84, %p85
      %p87 = scmp.ne.s32.totalorder %s75, %s76
      %p88 = scmp.eq.s32.totalorder %s24, 1
      %p89 = por %p87, %p88
      %p91 = scmp.ne.s32.totalorder %s76, %s90
      %p92 = scmp.eq.s32.totalorder %s24, 0
      %p93 = por %p91, %p92
      %s95 = sadd.s32 %s94, 1
      %p98 = scmp.eq.s32.totalorder %s18, 1
      %p99 = scmp.ne.s32.totalorder %s94, %s96
      %p100 = scmp.eq.s32.totalorder %s18, 0
      %p101 = por %p99, %p100
      %p102 = scmp.ne.s32.totalorder %s94, %s96
      %p103 = scmp.eq.s32.totalorder %s23, 1
      %p104 = por %p102, %p103
      %p105 = scmp.ne.s32.totalorder %s96, %s97
      %p106 = scmp.eq.s32.totalorder %s23, 0
      %p107 = por %p105, %p106
      %p108 = scmp.ne.s32.totalorder %s96, %s97
      %p109 = scmp.eq.s32.totalorder %s24, 1
      %p110 = por %p108, %p109
      %p112 = scmp.ne.s32.totalorder %s97, %s111
      %p113 = scmp.eq.s32.totalorder %s24, 0
      %p114 = por %p112, %p113
      %s116 = sadd.s32 %s115, 1
      %p119 = scmp.eq.s32.totalorder %s18, 1
      %p120 = scmp.ne.s32.totalorder %s115, %s117
      %p121 = scmp.eq.s32.totalorder %s18, 0
      %p122 = por %p120, %p121
      %p123 = scmp.ne.s32.totalorder %s115, %s117
      %p124 = scmp.eq.s32.totalorder %s23, 1
      %p125 = por %p123, %p124
      %p126 = scmp.ne.s32.totalorder %s117, %s118
      %p127 = scmp.eq.s32.totalorder %s23, 0
      %p128 = por %p126, %p127
      %p129 = scmp.ne.s32.totalorder %s117, %s118
      %p130 = scmp.eq.s32.totalorder %s24, 1
      %p131 = por %p129, %p130
      %p133 = scmp.ne.s32.totalorder %s118, %s132
      %p134 = scmp.eq.s32.totalorder %s24, 0
      %p135 = por %p133, %p134
      %s136 = ssub.s32 %s18, %s25
      %p137 = scmp.eq.s32.totalorder %s136, 0
      %s139 = sadd.s32 %s138, 1
      %s140 = scalar_select %p137, %s138, %s139
      %p143 = pneg %p137
      %p144 = scmp.eq.s32.totalorder %s18, 1
      %p145 = por %p143, %p144
      %p146 = scmp.ne.s32.totalorder %s138, %s141
      %p147 = scmp.eq.s32.totalorder %s18, 0
      %p148 = por %p146, %p147
      %p149 = scmp.ne.s32.totalorder %s138, %s141
      %p150 = scmp.eq.s32.totalorder %s23, 1
      %p151 = por %p149, %p150
      %p152 = scmp.ne.s32.totalorder %s141, %s142
      %p153 = scmp.eq.s32.totalorder %s23, 0
      %p154 = por %p152, %p153
      %p155 = scmp.ne.s32.totalorder %s141, %s142
      %p156 = scmp.eq.s32.totalorder %s24, 1
      %p157 = por %p155, %p156
      %p159 = scmp.ne.s32.totalorder %s142, %s158
      %p160 = scmp.eq.s32.totalorder %s24, 0
      %p161 = por %p159, %p160
      %p162 = scmp.le.s32.totalorder 1, %s18
      %p163 = scmp.lt.s32.totalorder %s18, 3
      %p164 = pnand %p162, %p163
      %p165 = pneg %p164
      // Predicated region
      $region9: #{tpu_custom_call.1} parent=5 // pred_check
        _
      $region10: #{tpu_custom_call.1} parent=5 // pred_check_branch
        %167 = sbr.rel (%p164) target = $region12
      $region11: #{tpu_custom_call.1} parent=5 // pred_region
        %s168 = ssub.s32 %s18, 1
        // Predicated region
        $region13: #{tpu_custom_call.1} parent=11 // pred_check
          %p169 = pneg %p65
        $region14: #{tpu_custom_call.1} parent=11 // pred_check_branch
          %171 = sbr.rel (%p169) target = $region16
        $region15: #{tpu_custom_call.1} parent=11 // pred_region
          %s173 = ssub.s32 256, 256
          %174 = vsyncadd [#allocation6], %s173
          %s175 = sshll.u32 [#allocation5], 4
          %s176 = int_to_ptr.vmem [resolvable:$true] %s175
          %181 = dma.hbm_to_vmem [thread:$0]  %s1, 256, %s176, [#allocation6], 64, 64, 4
        $region16: #{tpu_custom_call.1} parent=11 // pred_fallthru
          _
        // Predicated region
        $region17: #{tpu_custom_call.1} parent=11 // pred_check
          %p182 = pneg %p86
        $region18: #{tpu_custom_call.1} parent=11 // pred_check_branch
          %184 = sbr.rel (%p182) target = $region20
        $region19: #{tpu_custom_call.1} parent=11 // pred_region
          _
        $region20: #{tpu_custom_call.1} parent=11 // pred_fallthru
          _
        // Predicated region
        $region21: #{tpu_custom_call.1} parent=11 // pred_check
          %p185 = pneg %p107
        $region22: #{tpu_custom_call.1} parent=11 // pred_check_branch
          %187 = sbr.rel (%p185) target = $region24
        $region23: #{tpu_custom_call.1} parent=11 // pred_region
          %s189 = ssub.s32 256, 256
          %190 = vsyncadd [#allocation6], %s189
          %s191 = sshll.u32 [#allocation7], 4
          %s192 = int_to_ptr.vmem [resolvable:$true] %s191
          %197 = dma.hbm_to_vmem [thread:$0]  %s3, 256, %s192, [#allocation6], 64, 64, 4
        $region24: #{tpu_custom_call.1} parent=11 // pred_fallthru
          _
        // Predicated region
        $region25: #{tpu_custom_call.1} parent=11 // pred_check
          %p198 = pneg %p128
        $region26: #{tpu_custom_call.1} parent=11 // pred_check_branch
          %200 = sbr.rel (%p198) target = $region28
        $region27: #{tpu_custom_call.1} parent=11 // pred_region
          _
        $region28: #{tpu_custom_call.1} parent=11 // pred_fallthru
          _
      $region12: #{tpu_custom_call.1} parent=5 // pred_fallthru
        _
      %p201 = scmp.lt.s32.totalorder %s18, 2
      // Predicated region
      $region29: #{tpu_custom_call.1} parent=5 // pred_check
        %p202 = pneg %p201
      $region30: #{tpu_custom_call.1} parent=5 // pred_check_branch
        %204 = sbr.rel (%p202) target = $region32
      $region31: #{tpu_custom_call.1} parent=5 // pred_region
        // Predicated region
        $region33: #{tpu_custom_call.1} parent=31 // pred_check
          %p205 = pneg %p38
        $region34: #{tpu_custom_call.1} parent=31 // pred_check_branch
          %207 = sbr.rel (%p205) target = $region36
        $region35: #{tpu_custom_call.1} parent=31 // pred_region
          %s208 = sand.u32 %s28, 1
          %s209 = scalar_lea.sflag [#allocation3], %s208
          %s210 = sand.u32 %s28, 1
          %s211 = smul.addr %s210, 16
          %s212 = scalar_lea.vmem [#allocation2], %s211
          %s213 = smul.u32 2, %s18
          %s214 = ssub.s32 3, %s213
          %p215 = scmp.lt.s32.totalorder %s214, 2
          %s216 = scalar_select %p215, %s214, 2
          %s217 = smul.u32 128, %s216
          %s219 = ssub.s32 256, %s217
          %220 = vsyncadd %s209, %s219
          %p221 = scmp.ne.s32.totalorder 0, %s217
          %s222 = smul.addr %s213, 128
          %s223 = scalar_lea.hbm %s0, %s222
          %s224 = smul.u32 8, %s216
          %s225 = sshll.u32 %s212, 4
          %s226 = int_to_ptr.vmem [resolvable:$true] %s225
          %s227 = sshll.u32 %s224, 4
          %231 = dma.hbm_to_vmem [thread:$0]  (%p221), %s223, %s227, %s226, %s209, 128, 128, 8
        $region36: #{tpu_custom_call.1} parent=31 // pred_fallthru
          _
      $region32: #{tpu_custom_call.1} parent=5 // pred_fallthru
        _
      %p232 = scmp.le.s32.totalorder 1, %s18
      %p233 = scmp.lt.s32.totalorder %s18, 3
      %p234 = pnand %p232, %p233
      %p235 = pneg %p234
      // Predicated region
      $region37: #{tpu_custom_call.1} parent=5 // pred_check
        _
      $region38: #{tpu_custom_call.1} parent=5 // pred_check_branch
        %237 = sbr.rel (%p234) target = $region40
      $region39: #{tpu_custom_call.1} parent=5 // pred_region
        %s238 = ssub.s32 %s18, 1
        %s239 = sand.u32 %s31, 1
        %s240 = scalar_lea.sflag [#allocation3], %s239
        %s241 = sand.u32 %s31, 1
        %s242 = smul.addr %s241, 16
        %s243 = scalar_lea.vmem [#allocation2], %s242
        // Predicated region
        $region41: #{tpu_custom_call.1} parent=39 // pred_check
          %p244 = pneg %p44
        $region42: #{tpu_custom_call.1} parent=39 // pred_check_branch
          %246 = sbr.rel (%p244) target = $region44
        $region43: #{tpu_custom_call.1} parent=39 // pred_region
          %247 = dma.done %s240, 256
        $region44: #{tpu_custom_call.1} parent=39 // pred_fallthru
          _
        // Predicated region
        $region45: #{tpu_custom_call.1} parent=39 // pred_check
          %p248 = pneg %p65
        $region46: #{tpu_custom_call.1} parent=39 // pred_check_branch
          %250 = sbr.rel (%p248) target = $region48
        $region47: #{tpu_custom_call.1} parent=39 // pred_region
          %251 = dma.done [#allocation6], 256
        $region48: #{tpu_custom_call.1} parent=39 // pred_fallthru
          _
        // Predicated region
        $region49: #{tpu_custom_call.1} parent=39 // pred_check
          %p252 = pneg %p107
        $region50: #{tpu_custom_call.1} parent=39 // pred_check_branch
          %254 = sbr.rel (%p252) target = $region52
        $region51: #{tpu_custom_call.1} parent=39 // pred_region
          %255 = dma.done [#allocation6], 256
        $region52: #{tpu_custom_call.1} parent=39 // pred_fallthru
          _
        %s256 = sand.u32 %s31, 1
        %s257 = scalar_lea.sflag [#allocation3], %s256
        %s258 = sand.u32 %s31, 1
        %s259 = smul.addr %s258, 16
        %s260 = scalar_lea.vmem [#allocation2], %s259
        %p261 = pneg %p44
        %p262 = pneg %p41
        %p263 = pneg %p65
        %p264 = pneg %p62
        %p265 = pneg %p86
        %p266 = pneg %p83
        %p267 = pneg %p107
        %p268 = pneg %p104
        %p269 = pneg %p128
        %p270 = pneg %p125
        %p271 = pneg %p154
        %p272 = pneg %p151
        %s273 = sand.u32 %s141, 1
        %s274 = scalar_lea.sflag [#allocation4], %s273
        %s275 = sand.u32 %s141, 1
        %s276 = smul.addr %s275, 8
        %s277 = scalar_lea.vmem [#allocation8], %s276
        %s278 = smul.u32 2, %s23
        %s279 = ssub.s32 3, %s278
        %p280 = scmp.lt.s32.totalorder %s279, 2
        %s281 = scalar_select %p280, %s279, 2
        %s282 = smul.u32 128, %s281
        %s283 = smul.u32 2, %s23
        %s284 = ssub.s32 3, %s283
        %p285 = scmp.lt.s32.totalorder %s284, 2
        %s286 = scalar_select %p285, %s284, 2
        %s287 = smul.u32 64, %s286
        %v289 = vld [vmem:[%s243] sm:$0xff]
        %v290 = vld [vmem:[%s243 + $0x8] sm:$0xff]
        %v291 = vpack.c.bf16 %v290, %v289
        %v292 = vld [vmem:[#allocation5] sm:$0xf]
        %v293 = vld [vmem:[#allocation5 + $0x4] sm:$0xf]
        %v294 = vld [vmem:[#allocation5 + $0x8] sm:$0xf]
        %v295 = vld [vmem:[#allocation5 + $0xc] sm:$0xf]
        %v296 = vld [vmem:[%s2] sm:$0x1]
        %v298 = vlaneseq
        %v299 = vshrl.u32 %v298, 7
        %v300 = vsub.s32 0, %v299
        %v301 = vrot.slane %v296, %v300
        %v307 = vunpack.c.l.b16 %v292
        %v308 = vunpack.c.l.b16 %v293
        %v309 = vunpack.c.l.b16 %v294
        %v310 = vunpack.c.l.b16 %v295
        %v311 = vpack.c.b16 %v308, %v307
        %v312 = vpack.c.b16 %v310, %v309
        %vm315 = vcmask 261120
        %v317 = vsel %vm315, %v291, 0
        %319 = vmatprep.subr.bf16.mxu0 0
        %320 = vmatpush1.bf16.msra.mxu0 %v311
        %321 = vmatprep.subr.bf16.mxu0 0
        %322 = vmatpush1.bf16.msra.mxu0 %v312
        %323 = vmatprep.subr.bf16.mxu0 0
        %324 = vmatpush1.bf16.msra.mxu0 0
        %325 = vmatprep.subr.bf16.mxu0 0
        %326 = vmatpush1.bf16.msra.mxu0 0
        %327 = vmatprep.subr.bf16.mxu0 0
        %328 = vmatpush1.bf16.msra.mxu0 0
        %329 = vmatprep.subr.bf16.mxu0 0
        %330 = vmatpush1.bf16.msra.mxu0 0
        %331 = vmatprep.subr.bf16.mxu0 0
        %332 = vmatpush1.bf16.msra.mxu0 0
        %333 = vmatprep.subr.bf16.mxu0 0
        %334 = vmatpush1.bf16.msra.mxu0 0
        %335 = vmatprep.subr.bf16.mxu0 0
        %336 = vmatpush1.bf16.msra.mxu0 0
        %337 = vmatprep.subr.bf16.mxu0 0
        %338 = vmatpush1.bf16.msra.mxu0 0
        %339 = vmatprep.subr.bf16.mxu0 0
        %340 = vmatpush1.bf16.msra.mxu0 0
        %341 = vmatprep.subr.bf16.mxu0 0
        %342 = vmatpush1.bf16.msra.mxu0 0
        %343 = vmatprep.subr.bf16.mxu0 0
        %344 = vmatpush1.bf16.msra.mxu0 0
        %345 = vmatprep.subr.bf16.mxu0 0
        %346 = vmatpush1.bf16.msra.mxu0 0
        %347 = vmatprep.subr.bf16.mxu0 0
        %348 = vmatpush1.bf16.msra.mxu0 0
        %349 = vmatprep.subr.bf16.mxu0 0
        %350 = vmatpush1.bf16.msra.mxu0 0
        %351 = vmatprep.mubr.bf16.mxu0 0
        %352 = vmatmul.mubr.bf16.gmra.mrb[0].mxu0 %v317
        %v353 = vpop.f32.mrb[0].mxu0
        %v354 = vadd.f32 %v301, %v353
        %v355 = vpop.f32.mrb[0].mxu0
        %v356 = vpop.f32.mrb[0].mxu0
        %v357 = vadd.f32 %v301, %v356
        %v358 = vpop.f32.mrb[0].mxu0
        %359 = vdwg.mxu0
        %v360 = vmax.f32 %v354, 0.0
        %v361 = vmax.f32 %v357, 0.0
        %v362 = vpack.c.bf16 %v361, %v360
        %v363 = vld [vmem:[#allocation7] sm:$0xf]
        %v364 = vld [vmem:[#allocation7 + $0x4] sm:$0xf]
        %v365 = vld [vmem:[#allocation7 + $0x8] sm:$0xf]
        %v366 = vld [vmem:[#allocation7 + $0xc] sm:$0xf]
        %v367 = vld [vmem:[%s4] sm:$0x1]
        %v369 = vlaneseq
        %v370 = vshrl.u32 %v369, 7
        %v371 = vsub.s32 0, %v370
        %v372 = vrot.slane %v367, %v371
        %v378 = vunpack.c.l.b16 %v363
        %v379 = vunpack.c.l.b16 %v364
        %v380 = vunpack.c.l.b16 %v365
        %v381 = vunpack.c.l.b16 %v366
        %v382 = vpack.c.b16 %v379, %v378
        %v383 = vpack.c.b16 %v381, %v380
        %v387 = vsel %vm315, %v362, 0
        %389 = vmatprep.subr.bf16.mxu0 0
        %390 = vmatpush1.bf16.msra.mxu0 %v382
        %391 = vmatprep.subr.bf16.mxu0 0
        %392 = vmatpush1.bf16.msra.mxu0 %v383
        %393 = vmatprep.subr.bf16.mxu0 0
        %394 = vmatpush1.bf16.msra.mxu0 0
        %395 = vmatprep.subr.bf16.mxu0 0
        %396 = vmatpush1.bf16.msra.mxu0 0
        %397 = vmatprep.subr.bf16.mxu0 0
        %398 = vmatpush1.bf16.msra.mxu0 0
        %399 = vmatprep.subr.bf16.mxu0 0
        %400 = vmatpush1.bf16.msra.mxu0 0
        %401 = vmatprep.subr.bf16.mxu0 0
        %402 = vmatpush1.bf16.msra.mxu0 0
        %403 = vmatprep.subr.bf16.mxu0 0
        %404 = vmatpush1.bf16.msra.mxu0 0
        %405 = vmatprep.subr.bf16.mxu0 0
        %406 = vmatpush1.bf16.msra.mxu0 0
        %407 = vmatprep.subr.bf16.mxu0 0
        %408 = vmatpush1.bf16.msra.mxu0 0
        %409 = vmatprep.subr.bf16.mxu0 0
        %410 = vmatpush1.bf16.msra.mxu0 0
        %411 = vmatprep.subr.bf16.mxu0 0
        %412 = vmatpush1.bf16.msra.mxu0 0
        %413 = vmatprep.subr.bf16.mxu0 0
        %414 = vmatpush1.bf16.msra.mxu0 0
        %415 = vmatprep.subr.bf16.mxu0 0
        %416 = vmatpush1.bf16.msra.mxu0 0
        %417 = vmatprep.subr.bf16.mxu0 0
        %418 = vmatpush1.bf16.msra.mxu0 0
        %419 = vmatprep.subr.bf16.mxu0 0
        %420 = vmatpush1.bf16.msra.mxu0 0
        %421 = vmatprep.mubr.bf16.mxu0 0
        %422 = vmatmul.mubr.bf16.gmra.mrb[0].mxu0 %v387
        %v423 = vpop.f32.mrb[0].mxu0
        %v424 = vadd.f32 %v372, %v423
        %v425 = vpop.f32.mrb[0].mxu0
        %v426 = vpop.f32.mrb[0].mxu0
        %v427 = vadd.f32 %v372, %v426
        %v428 = vpop.f32.mrb[0].mxu0
        %429 = vdwg.mxu0
        %v430 = vpack.c.bf16 %v427, %v424
        %v432 = vunpack.c.l.b16 %v430
        %v433 = vunpack.c.h.b16 %v430
        %v434 = vpack.c.b16 %v432, %v432
        %v435 = vpack.c.b16 %v433, %v433
        %438 = vst [vmem:[%s277] sm:$0xf] %v434
        %439 = vst [vmem:[%s277 + $0x4] sm:$0xf] %v435
        %s440 = sand.u32 %s141, 1
        %s441 = scalar_lea.sflag [#allocation4], %s440
        %s442 = sand.u32 %s141, 1
        %s443 = smul.addr %s442, 8
        %s444 = scalar_lea.vmem [#allocation8], %s443
        // Predicated region
        $region53: #{tpu_custom_call.1} parent=39 // pred_check
          %p445 = pneg %p151
        $region54: #{tpu_custom_call.1} parent=39 // pred_check_branch
          %447 = sbr.rel (%p445) target = $region56
        $region55: #{tpu_custom_call.1} parent=39 // pred_region
          %s448 = smul.u32 2, %s23
          %s449 = ssub.s32 3, %s448
          %p450 = scmp.lt.s32.totalorder %s449, 2
          %s451 = scalar_select %p450, %s449, 2
          %s452 = smul.u32 64, %s451
          %s454 = ssub.s32 128, %s452
          %455 = vsyncadd %s441, %s454
          %p456 = scmp.ne.s32.totalorder 0, %s452
          %s457 = smul.addr %s448, 64
          %s458 = scalar_lea.hbm %s5, %s457
          %s459 = smul.u32 4, %s451
          %s460 = sshll.u32 %s444, 4
          %s461 = int_to_ptr.vmem [resolvable:$true] %s460
          %s462 = sshll.u32 %s459, 4
          %466 = dma.vmem_to_hbm [thread:$0]  (%p456), %s461, %s462, %s458, %s441, 64, 64, 4
        $region56: #{tpu_custom_call.1} parent=39 // pred_fallthru
          _
      $region40: #{tpu_custom_call.1} parent=5 // pred_fallthru
        _
      %p467 = scmp.le.s32.totalorder 2, %s18
      // Predicated region
      $region57: #{tpu_custom_call.1} parent=5 // pred_check
        %p468 = pneg %p467
      $region58: #{tpu_custom_call.1} parent=5 // pred_check_branch
        %470 = sbr.rel (%p468) target = $region60
      $region59: #{tpu_custom_call.1} parent=5 // pred_region
        %s471 = ssub.s32 %s18, 2
        // Predicated region
        $region61: #{tpu_custom_call.1} parent=59 // pred_check
          %p472 = pneg %p157
        $region62: #{tpu_custom_call.1} parent=59 // pred_check_branch
          %474 = sbr.rel (%p472) target = $region64
        $region63: #{tpu_custom_call.1} parent=59 // pred_region
          %s475 = sand.u32 %s142, 1
          %s476 = scalar_lea.sflag [#allocation4], %s475
          %s477 = sand.u32 %s142, 1
          %s478 = smul.addr %s477, 8
          %s479 = scalar_lea.vmem [#allocation8], %s478
          %480 = dma.done %s476, 128
        $region64: #{tpu_custom_call.1} parent=59 // pred_fallthru
          _
      $region60: #{tpu_custom_call.1} parent=5 // pred_fallthru
        _
    $region6: #{tpu_custom_call.1} parent=1 // loop_footer
      %s22 = sadd.s32 1, %s18
    $region7: #{tpu_custom_call.1} parent=1 // loop_footer_branch
      %17 = sbr.rel target = $region3
    $region8: #{tpu_custom_call.1} parent=1 // loop_exit
      _
    %481 = vsyncpa [#allocation3], 1
    %s482 = scalar_lea.sflag [#allocation3], 1
    %483 = vsyncpa %s482, 1
    %484 = vsyncpa [#allocation6], 1
    %485 = vsyncpa [#allocation4], 1
    %s486 = scalar_lea.sflag [#allocation4], 1
    %487 = vsyncpa %s486, 1

</llo_original>
